<compile_context>
chip_gen: v6e
topology: v6e:2x2x1
jax: 0.10.0
libtpu: 0.0.40
codegen_flags: <defaults>
</compile_context>

<pallas_src>
import functools

import jax
import jax.numpy as jnp
from jax.experimental import pallas as pl
from jax.experimental.pallas import tpu as pltpu


def _round_up(v, m):
    return (v + m - 1) // m * m


# ----------------------------------------------------------------------------
# Fused kernel: merged conv (im2col matmul) + max-pool + ReLU + FC.
# ----------------------------------------------------------------------------
def _textcnn_kernel(emb_ref, w_ref, mb_ref, fcw_ref, fcb_ref, out_ref, *,
                    k_max, t_chunk, n_chunks):
    # emb_ref: (Bb, T_pad, E)     bf16 zero-padded embeddings (halo = k_max-1)
    # w_ref:   (k_max*E, F_tot)   bf16 merged conv weights (im2col layout)
    # mb_ref:  (t_out, F_tot)     f32 conv bias + (-1e30) time-validity mask
    # fcw_ref: (F_tot, C_pad)     bf16 FC weight (zero padded rows/cols)
    # fcb_ref: (1, C_pad)         f32 FC bias
    # out_ref: (Bb, C_pad)        f32 logits (lane-dense; sliced to C outside)
    bb = emb_ref.shape[0]
    e = emb_ref.shape[-1]
    f_tot = w_ref.shape[-1]
    m = bb * t_chunk

    pooled = None
    for c in range(n_chunks):                       # static unroll over time
        t0 = c * t_chunk
        # im2col over the k_max taps -> one K = k_max*E MXU matmul per chunk
        # covering all filters of all conv sizes at once.
        lhs = jnp.concatenate(
            [emb_ref[:, t0 + j:t0 + j + t_chunk, :].reshape(m, e)
             for j in range(k_max)],
            axis=-1)                                # (m, k_max*E) bf16
        acc = jnp.dot(lhs, w_ref[...], preferred_element_type=jnp.float32)
        # bias + per-conv/per-alignment time mask folded into one f32 add.
        acc = acc.reshape(bb, t_chunk, f_tot) + mb_ref[t0:t0 + t_chunk, :][None]
        cmax = jnp.max(acc, axis=1)                 # (Bb, F_tot)
        pooled = cmax if pooled is None else jnp.maximum(pooled, cmax)

    feat = jnp.maximum(pooled, 0.0).astype(jnp.bfloat16)   # ReLU
    # TODO(synk): nn.Dropout is identity in eval mode; train-mode dropout would
    # use pltpu.prng_seed / pltpu.prng_random_bits here.
    out_ref[...] = (jnp.dot(feat, fcw_ref[...],
                            preferred_element_type=jnp.float32)
                    + fcb_ref[...])


# ----------------------------------------------------------------------------
# One-time parameter packing (hoisted out of the per-call hot path).
# ----------------------------------------------------------------------------
def prepare_textcnn(params, seqlen, *, t_chunk_max=256):
    convlen = tuple(params["convlen"])
    k_max = max(convlen)
    n_convs = len(convlen)
    emb_dim = params["emb"].shape[1]
    nfilt = params["conv_w"][0].shape[-1]
    nclasses = params["fc_w"].shape[-1]

    f_tot = _round_up(n_convs * nfilt, 128)
    c_pad = _round_up(nclasses, 128)
    t_need = seqlen + k_max - 1
    n_chunks = -(-t_need // t_chunk_max)
    t_chunk = _round_up(-(-t_need // n_chunks), 16)
    t_out = n_chunks * t_chunk
    t_pad = t_out + k_max - 1

    # Merge all convs into one k_max-tap conv by right-aligning each conv's
    # taps inside a zero-padded (k_max, E, F_tot) weight block, then flatten
    # to the (k_max*E, F_tot) im2col layout the kernel contracts against.
    w_all = jnp.zeros((k_max, emb_dim, f_tot), jnp.float32)
    mb = jnp.zeros((t_out, f_tot), jnp.float32)     # bias folded into mask
    for c, (k, w, b) in enumerate(zip(convlen, params["conv_w"],
                                      params["conv_b"])):
        lo = c * nfilt
        w_all = w_all.at[k_max - k:, :, lo:lo + nfilt].set(w)
        valid = (jnp.arange(t_out) < (seqlen + k - 1)).astype(jnp.float32)
        col = ((valid - 1.0) * 1e30)[:, None] + b.reshape(1, nfilt)
        mb = mb.at[:, lo:lo + nfilt].set(col)
    w2 = w_all.reshape(k_max * emb_dim, f_tot).astype(jnp.bfloat16)

    fc_w = jnp.zeros((f_tot, c_pad), jnp.float32)
    fc_w = fc_w.at[:n_convs * nfilt, :nclasses].set(params["fc_w"])
    fc_b = jnp.zeros((1, c_pad), jnp.float32)
    fc_b = fc_b.at[:, :nclasses].set(params["fc_b"].reshape(1, nclasses))

    return {
        "emb_bf16": params["emb"].astype(jnp.bfloat16),
        "w2": w2, "mb": mb,
        "fc_w": fc_w.astype(jnp.bfloat16), "fc_b": fc_b,
        "seqlen": seqlen, "k_max": k_max, "emb_dim": emb_dim,
        "f_tot": f_tot, "c_pad": c_pad, "nclasses": nclasses,
        "t_chunk": t_chunk, "t_out": t_out, "t_pad": t_pad,
        "n_chunks": n_chunks,
    }


# ----------------------------------------------------------------------------
# VMEM-driven batch-block selection.
# ----------------------------------------------------------------------------
def _vmem_capacity_bytes():
    try:
        return int(pltpu.get_tpu_info().vmem_capacity_bytes)
    except Exception:
        return 64 << 20            # conservative: v7x per-TensorCore VMEM


def _pick_batch_block(batch, p):
    e_lane = _round_up(p["emb_dim"], 128)           # minor dim is lane-padded
    ke_lane = _round_up(p["k_max"] * p["emb_dim"], 128)
    f_tot, c_pad = p["f_tot"], p["c_pad"]
    t_pad16 = _round_up(p["t_pad"], 16)             # bf16 sublane tile
    # Constant (weight) blocks, counted double-buffered to be safe.
    fixed = 2 * (_round_up(p["k_max"] * p["emb_dim"], 16) * f_tot * 2
                 + p["t_out"] * f_tot * 4
                 + f_tot * c_pad * 2
                 + 8 * c_pad * 4)

    def footprint(bb):
        emb_blk = 2 * bb * t_pad16 * e_lane * 2     # double-buffered bf16 input
        out_blk = 2 * bb * c_pad * 4
        live = bb * p["t_chunk"] * (2 * ke_lane * 2     # im2col lhs (+ copy)
                                    + 2 * f_tot * 4)    # f32 acc (+ copy)
        return fixed + emb_blk + out_blk + live

    vmem_limit = min(_vmem_capacity_bytes() * 3 // 4, 96 << 20)
    budget = vmem_limit - (4 << 20)                 # compiler-scratch headroom
    bb = 8
    while bb < 512 and footprint(bb + 8) <= budget:
        bb += 8

    b8 = _round_up(batch, 8)
    bb = min(bb, b8)
    n_blk = -(-b8 // bb)
    if b8 >= 16:
        n_blk = max(n_blk, 2)       # keep both v7x TensorCores busy
    bb = min(bb, _round_up(-(-b8 // n_blk), 8))
    return bb, int(vmem_limit)


# ----------------------------------------------------------------------------
# Forward pass (gather stays in XLA; everything else is the fused kernel).
# ----------------------------------------------------------------------------
def textcnn_forward(packed, x):
    batch, seqlen = x.shape
    assert seqlen == packed["seqlen"], "prepare_textcnn built for another seqlen"
    k_max, emb_dim = packed["k_max"], packed["emb_dim"]
    t_pad, t_out, t_chunk = packed["t_pad"], packed["t_out"], packed["t_chunk"]
    f_tot, c_pad = packed["f_tot"], packed["c_pad"]
    p = k_max - 1

    bb, vmem_limit = _pick_batch_block(batch, packed)
    b_pad = _round_up(batch, bb)

    # Gather straight into the padded (b_pad, t_pad, E) bf16 layout: halo,
    # alignment and batch-padding slots use token id 0 and are zeroed by the
    # same sign(x) mask the PyTorch model applies -> no separate jnp.pad
    # round-trip of the float activations through HBM.
    x_pad = jnp.zeros((b_pad, t_pad), x.dtype)
    x_pad = x_pad.at[:batch, p:p + seqlen].set(x)
    emb_p = (jnp.take(packed["emb_bf16"], x_pad, axis=0)
             * (x_pad != 0).astype(jnp.bfloat16)[..., None])
    # TODO(synk): the embedding-table gather stays in XLA; an in-kernel version
    # would need a manual DMA gather driven by scalar-prefetched token ids.

    flops = (2 * b_pad * t_out * (k_max * emb_dim) * f_tot
             + 2 * b_pad * f_tot * c_pad)
    bytes_accessed = (emb_p.size * 2 + packed["w2"].size * 2
                      + packed["mb"].size * 4 + packed["fc_w"].size * 2
                      + packed["fc_b"].size * 4 + b_pad * c_pad * 4)

    kern = functools.partial(_textcnn_kernel, k_max=k_max, t_chunk=t_chunk,
                             n_chunks=packed["n_chunks"])
    out = pl.pallas_call(
        kern,
        out_shape=jax.ShapeDtypeStruct((b_pad, c_pad), jnp.float32),
        grid=(b_pad // bb,),
        in_specs=[
            pl.BlockSpec((bb, t_pad, emb_dim), lambda i: (i, 0, 0)),
            pl.BlockSpec((k_max * emb_dim, f_tot), lambda i: (0, 0)),
            pl.BlockSpec((t_out, f_tot), lambda i: (0, 0)),
            pl.BlockSpec((f_tot, c_pad), lambda i: (0, 0)),
            pl.BlockSpec((1, c_pad), lambda i: (0, 0)),
        ],
        out_specs=pl.BlockSpec((bb, c_pad), lambda i: (i, 0)),
        compiler_params=pltpu.CompilerParams(
            dimension_semantics=("parallel",),
            vmem_limit_bytes=vmem_limit),
        cost_estimate=pl.CostEstimate(flops=int(flops), transcendentals=0,
                                      bytes_accessed=int(bytes_accessed)),
    )(emb_p, packed["w2"], packed["mb"], packed["fc_w"], packed["fc_b"])
    return out[:batch, :packed["nclasses"]]


# ----------------------------------------------------------------------------
# Parameter init + pure-JAX reference (for self-check).
# ----------------------------------------------------------------------------
def init_params(key, nwords, embedding_dim, nfilters, convlen, nclasses):
    keys = jax.random.split(key, 3 + 2 * len(convlen))
    emb = jax.random.uniform(keys[0], (nwords, embedding_dim),
                             minval=-0.25, maxval=0.25, dtype=jnp.float32)
    emb = emb.at[0].set(0.0)                                  # zero pad row
    conv_w, conv_b = [], []
    for i, k in enumerate(convlen):
        conv_w.append(0.1 * jax.random.normal(
            keys[1 + 2 * i], (k, embedding_dim, nfilters), dtype=jnp.float32))
        conv_b.append(0.01 * jax.random.normal(
            keys[2 + 2 * i], (1, nfilters), dtype=jnp.float32))
    fc_w = 0.1 * jax.random.normal(
        keys[-2], (nfilters * len(convlen), nclasses), dtype=jnp.float32)
    fc_b = 0.01 * jax.random.normal(keys[-1], (nclasses,), dtype=jnp.float32)
    return {"emb": emb, "conv_w": conv_w, "conv_b": conv_b,
            "fc_w": fc_w, "fc_b": fc_b, "convlen": convlen}


def _reference_forward(params, x):
    emb = jnp.take(params["emb"], x, axis=0)
    emb = emb * jnp.sign(x).astype(emb.dtype)[..., None]
    feats = []
    for k, w, b in zip(params["convlen"], params["conv_w"], params["conv_b"]):
        pad = k - 1
        t_out = x.shape[1] + k - 1
        ep = jnp.pad(emb, ((0, 0), (pad, pad), (0, 0)))
        conv = b.reshape(1, 1, -1) + sum(
            jnp.einsum("bte,ef->btf", ep[:, i:i + t_out, :], w[i],
                       precision=jax.lax.Precision.HIGHEST)
            for i in range(k))
        feats.append(jnp.max(conv, axis=1))
    feat = jnp.maximum(jnp.concatenate(feats, axis=1), 0.0)
    return jnp.matmul(feat, params["fc_w"],
                      precision=jax.lax.Precision.HIGHEST) + params["fc_b"]


if __name__ == "__main__":
    nwords, embedding_dim, nfilters, convlen, nclasses = 50, 32, 16, (3, 4, 5), 5
    batch, seqlen = 2, 8

    root = jax.random.PRNGKey(0)
    pkey, xkey = jax.random.split(root)
    params = init_params(pkey, nwords, embedding_dim, nfilters, convlen, nclasses)
    x = jax.random.randint(xkey, (batch, seqlen), 0, nwords, dtype=jnp.int32)

    packed = prepare_textcnn(params, seqlen)          # one-time weight packing
    logits = textcnn_forward(packed, x)
    logits = jax.block_until_ready(logits)
    assert logits.shape == (batch, nclasses)
    assert logits.dtype == jnp.float32

    ref = _reference_forward(params, x)
    err = float(jnp.max(jnp.abs(logits - ref)))
    assert err < 2e-2, f"max abs error vs reference: {err}"
    print("KERNEL_OK")
</pallas_src>

<mosaic_0001>
module attributes {stable_mosaic.version = 11 : i64} {
  func.func @_textcnn_kernel(%arg0: i32, %arg1: memref<8x20x32xbf16, #tpu.memory_space<vmem>>, %arg2: memref<160x128xbf16, #tpu.memory_space<vmem>>, %arg3: memref<16x128xf32, #tpu.memory_space<vmem>>, %arg4: memref<128x128xbf16, #tpu.memory_space<vmem>>, %arg5: memref<1x128xf32, #tpu.memory_space<vmem>>, %arg6: memref<8x128xf32, #tpu.memory_space<vmem>>) attributes {dimension_semantics = [#tpu.dimension_semantics<parallel>], iteration_bounds = array<i64: 1>, scalar_prefetch = 0 : i64, scratch_operands = 0 : i64, tpu.core_type = #tpu.core_type<tc>, window_params = [{transform_indices = @transform_0, window_bounds = array<i64: 8, 20, 32>}, {pipeline_mode = #tpu.pipeline_mode<synchronous>, transform_indices = @transform_1, window_bounds = array<i64: 160, 128>}, {pipeline_mode = #tpu.pipeline_mode<synchronous>, transform_indices = @transform_2, window_bounds = array<i64: 16, 128>}, {pipeline_mode = #tpu.pipeline_mode<synchronous>, transform_indices = @transform_3, window_bounds = array<i64: 128, 128>}, {pipeline_mode = #tpu.pipeline_mode<synchronous>, transform_indices = @transform_4, window_bounds = array<i64: 1, 128>}, {transform_indices = @transform_5, window_bounds = array<i64: 8, 128>}]} {
    %c0 = arith.constant 0 : index
    %c0_0 = arith.constant 0 : index
    %c0_1 = arith.constant 0 : index
    %0 = vector.load %arg1[%c0, %c0_0, %c0_1] : memref<8x20x32xbf16, #tpu.memory_space<vmem>>, vector<8x16x32xbf16>
    %1 = vector.shape_cast %0 : vector<8x16x32xbf16> to vector<128x32xbf16>
    %c0_2 = arith.constant 0 : index
    %c1 = arith.constant 1 : index
    %c0_3 = arith.constant 0 : index
    %2 = vector.load %arg1[%c0_2, %c1, %c0_3] : memref<8x20x32xbf16, #tpu.memory_space<vmem>>, vector<8x16x32xbf16>
    %3 = vector.shape_cast %2 : vector<8x16x32xbf16> to vector<128x32xbf16>
    %c0_4 = arith.constant 0 : index
    %c2 = arith.constant 2 : index
    %c0_5 = arith.constant 0 : index
    %4 = vector.load %arg1[%c0_4, %c2, %c0_5] : memref<8x20x32xbf16, #tpu.memory_space<vmem>>, vector<8x16x32xbf16>
    %5 = vector.shape_cast %4 : vector<8x16x32xbf16> to vector<128x32xbf16>
    %c0_6 = arith.constant 0 : index
    %c3 = arith.constant 3 : index
    %c0_7 = arith.constant 0 : index
    %6 = vector.load %arg1[%c0_6, %c3, %c0_7] : memref<8x20x32xbf16, #tpu.memory_space<vmem>>, vector<8x16x32xbf16>
    %7 = vector.shape_cast %6 : vector<8x16x32xbf16> to vector<128x32xbf16>
    %c0_8 = arith.constant 0 : index
    %c4 = arith.constant 4 : index
    %c0_9 = arith.constant 0 : index
    %8 = vector.load %arg1[%c0_8, %c4, %c0_9] : memref<8x20x32xbf16, #tpu.memory_space<vmem>>, vector<8x16x32xbf16>
    %9 = vector.shape_cast %8 : vector<8x16x32xbf16> to vector<128x32xbf16>
    %10 = tpu.concatenate %1, %3, %5, %7, %9 in 1 : vector<128x32xbf16>, vector<128x32xbf16>, vector<128x32xbf16>, vector<128x32xbf16>, vector<128x32xbf16> -> vector<128x160xbf16>
    %c0_10 = arith.constant 0 : index
    %c0_11 = arith.constant 0 : index
    %11 = vector.load %arg2[%c0_10, %c0_11] : memref<160x128xbf16, #tpu.memory_space<vmem>>, vector<160x128xbf16>
    %cst = arith.constant dense<0.000000e+00> : vector<128x128xf32>
    %12 = tpu.matmul %10, %11, %cst {dimension_numbers = #tpu.dot_dimension_numbers<[1], [0], [0], [1], [0, 0, 1, 1], [], []>} : vector<128x160xbf16>, vector<160x128xbf16>, vector<128x128xf32> -> vector<128x128xf32>
    %13 = vector.shape_cast %12 : vector<128x128xf32> to vector<8x16x128xf32>
    %c0_12 = arith.constant 0 : index
    %c0_13 = arith.constant 0 : index
    %14 = vector.load %arg3[%c0_12, %c0_13] : memref<16x128xf32, #tpu.memory_space<vmem>>, vector<16x128xf32>
    %15 = vector.shape_cast %14 : vector<16x128xf32> to vector<1x16x128xf32>
    %16 = vector.broadcast %15 : vector<1x16x128xf32> to vector<8x16x128xf32>
    %17 = arith.addf %13, %16 : vector<8x16x128xf32>
    %cst_14 = arith.constant dense<0xFF800000> : vector<8x128xf32>
    %18 = vector.multi_reduction <maximumf>, %17, %cst_14 [1] : vector<8x16x128xf32> to vector<8x128xf32>
    %cst_15 = arith.constant 0.000000e+00 : f32
    %19 = vector.broadcast %cst_15 : f32 to vector<8x128xf32>
    %20 = arith.maximumf %18, %19 : vector<8x128xf32>
    %21 = arith.truncf %20 : vector<8x128xf32> to vector<8x128xbf16>
    %c0_16 = arith.constant 0 : index
    %c0_17 = arith.constant 0 : index
    %22 = vector.load %arg4[%c0_16, %c0_17] : memref<128x128xbf16, #tpu.memory_space<vmem>>, vector<128x128xbf16>
    %cst_18 = arith.constant dense<0.000000e+00> : vector<8x128xf32>
    %23 = tpu.matmul %21, %22, %cst_18 {dimension_numbers = #tpu.dot_dimension_numbers<[1], [0], [0], [1], [0, 0, 1, 1], [], []>} : vector<8x128xbf16>, vector<128x128xbf16>, vector<8x128xf32> -> vector<8x128xf32>
    %c0_19 = arith.constant 0 : index
    %c0_20 = arith.constant 0 : index
    %24 = vector.load %arg5[%c0_19, %c0_20] : memref<1x128xf32, #tpu.memory_space<vmem>>, vector<1x128xf32>
    %25 = vector.broadcast %24 : vector<1x128xf32> to vector<8x128xf32>
    %26 = arith.addf %23, %25 : vector<8x128xf32>
    %c0_21 = arith.constant 0 : index
    %c0_22 = arith.constant 0 : index
    %27 = vector.load %arg6[%c0_21, %c0_22] : memref<8x128xf32, #tpu.memory_space<vmem>>, vector<8x128xf32>
    tpu.vector_store %arg6[%c0_21, %c0_22], %26 {strides = array<i32>} : memref<8x128xf32, #tpu.memory_space<vmem>>, vector<8x128xf32>,
    return
  }
  func.func @transform_0(%arg0: i32) -> (i32, i32, i32) {
    %c0_i32 = arith.constant 0 : i32
    %c0_i32_0 = arith.constant 0 : i32
    %c0_i32_1 = arith.constant 0 : i32
    return %arg0, %c0_i32, %c0_i32_0 : i32, i32, i32
  }
  func.func @transform_1(%arg0: i32) -> (i32, i32) {
    %c0_i32 = arith.constant 0 : i32
    %c0_i32_0 = arith.constant 0 : i32
    %c0_i32_1 = arith.constant 0 : i32
    return %c0_i32, %c0_i32_0 : i32, i32
  }
  func.func @transform_2(%arg0: i32) -> (i32, i32) {
    %c0_i32 = arith.constant 0 : i32
    %c0_i32_0 = arith.constant 0 : i32
    %c0_i32_1 = arith.constant 0 : i32
    return %c0_i32, %c0_i32_0 : i32, i32
  }
  func.func @transform_3(%arg0: i32) -> (i32, i32) {
    %c0_i32 = arith.constant 0 : i32
    %c0_i32_0 = arith.constant 0 : i32
    %c0_i32_1 = arith.constant 0 : i32
    return %c0_i32, %c0_i32_0 : i32, i32
  }
  func.func @transform_4(%arg0: i32) -> (i32, i32) {
    %c0_i32 = arith.constant 0 : i32
    %c0_i32_0 = arith.constant 0 : i32
    %c0_i32_1 = arith.constant 0 : i32
    return %c0_i32, %c0_i32_0 : i32, i32
  }
  func.func @transform_5(%arg0: i32) -> (i32, i32) {
    %c0_i32 = arith.constant 0 : i32
    %c0_i32_0 = arith.constant 0 : i32
    return %arg0, %c0_i32 : i32, i32
  }
}

</mosaic_0001>

<llo_original>
// kernel: tpu_custom_call.1
$region0: #{tpu_custom_call.1}
  #allocation0 [shape = 'u32[]', space=smem, size = 0x4, offset = 0x4, fixed_abs, tag = 'smem constant byte address 0x4 - core index']
  #allocation1 [shape = 'u32[144,128]{1,0:T(1,128)}', space=vmem, size = 0x12000, scoped, tag = 'internal scratch']
  %s0 = inlined_call_operand.vmem [shape: bf16[8,20,32], index: 0, kind: input, shape index: {}]
  %s1 = inlined_call_operand.vmem [shape: bf16[160,128], index: 1, kind: input, shape index: {}]
  %s2 = inlined_call_operand.vmem [shape: f32[16,128], index: 2, kind: input, shape index: {}]
  %s3 = inlined_call_operand.vmem [shape: bf16[128,128], index: 3, kind: input, shape index: {}]
  %s4 = inlined_call_operand.vmem [shape: f32[1,128], index: 4, kind: input, shape index: {}]
  %s5 = inlined_call_operand.hbm [shape: f32[8,128], index: 5, kind: output, shape index: {}]
  %s6 = sld [smem:[#allocation0]]
  $region30: #{tpu_custom_call.1} parent=0
    _
  %s8 = ssub.s32 1, %s6
  %s9 = scalar_select 0, %s8, %s6
  $region1: #{tpu_custom_call.1} parent=0
    #allocation2 [shape = 'u8[4096]{0}', space=vmem, size = 0x1000, scoped, tag = 'output window, operand 0, single buffered']
    #allocation3 [shape = 's32[1]{0}', space=sflag, size = 0x4, scoped, tag = 'scoped memory for tpu_custom_call.1']
    %10 = vsyncpa [#allocation3], 0
    // Predicated region
    $region2: #{tpu_custom_call.1} parent=1 // pred_check
      _
    $region3: #{tpu_custom_call.1} parent=1 // pred_check_branch
      %12 = sbr.rel (0) target = $region5
    $region4: #{tpu_custom_call.1} parent=1 // pred_region
      _
    $region5: #{tpu_custom_call.1} parent=1 // pred_fallthru
      _
    // Predicated region
    $region6: #{tpu_custom_call.1} parent=1 // pred_check
      _
    $region7: #{tpu_custom_call.1} parent=1 // pred_check_branch
      %14 = sbr.rel (0) target = $region9
    $region8: #{tpu_custom_call.1} parent=1 // pred_region
      _
    $region9: #{tpu_custom_call.1} parent=1 // pred_fallthru
      _
    // Predicated region
    $region10: #{tpu_custom_call.1} parent=1 // pred_check
      _
    $region11: #{tpu_custom_call.1} parent=1 // pred_check_branch
      %16 = sbr.rel (0) target = $region13
    $region12: #{tpu_custom_call.1} parent=1 // pred_region
      _
    $region13: #{tpu_custom_call.1} parent=1 // pred_fallthru
      _
    // Predicated region
    $region14: #{tpu_custom_call.1} parent=1 // pred_check
      _
    $region15: #{tpu_custom_call.1} parent=1 // pred_check_branch
      %18 = sbr.rel (0) target = $region17
    $region16: #{tpu_custom_call.1} parent=1 // pred_region
      _
    $region17: #{tpu_custom_call.1} parent=1 // pred_fallthru
      _
    // Predicated region
    $region18: #{tpu_custom_call.1} parent=1 // pred_check
      _
    $region19: #{tpu_custom_call.1} parent=1 // pred_check_branch
      %20 = sbr.rel (0) target = $region21
    $region20: #{tpu_custom_call.1} parent=1 // pred_region
      _
    $region21: #{tpu_custom_call.1} parent=1 // pred_fallthru
      _
    %v22 = vld [vmem:[%s0] sm:$0xf]
    %v23 = vld [vmem:[%s0 + $0x4] sm:$0xf]
    %v24 = vld [vmem:[%s0 + $0xc] sm:$0xf]
    %v25 = vld [vmem:[%s0 + $0x10] sm:$0xf]
    %v26 = vld [vmem:[%s0 + $0x18] sm:$0xf]
    %v27 = vld [vmem:[%s0 + $0x1c] sm:$0xf]
    %v28 = vld [vmem:[%s0 + $0x24] sm:$0xf]
    %v29 = vld [vmem:[%s0 + $0x28] sm:$0xf]
    %v30 = vld [vmem:[%s0 + $0x30] sm:$0xf]
    %v31 = vld [vmem:[%s0 + $0x34] sm:$0xf]
    %v32 = vld [vmem:[%s0 + $0x3c] sm:$0xf]
    %v33 = vld [vmem:[%s0 + $0x40] sm:$0xf]
    %v34 = vld [vmem:[%s0 + $0x48] sm:$0xf]
    %v35 = vld [vmem:[%s0 + $0x4c] sm:$0xf]
    %v36 = vld [vmem:[%s0 + $0x54] sm:$0xf]
    %v37 = vld [vmem:[%s0 + $0x58] sm:$0xf]
    %v38 = vld [vmem:[%s0 + $0x8] sm:$0x1]
    %v39 = vld [vmem:[%s0 + $0x14] sm:$0x1]
    %v40 = vld [vmem:[%s0 + $0x20] sm:$0x1]
    %v41 = vld [vmem:[%s0 + $0x2c] sm:$0x1]
    %v42 = vld [vmem:[%s0 + $0x38] sm:$0x1]
    %v43 = vld [vmem:[%s0 + $0x44] sm:$0x1]
    %v44 = vld [vmem:[%s0 + $0x50] sm:$0x1]
    %v45 = vld [vmem:[%s0 + $0x5c] sm:$0x1]
    %vm46 = vsmask.f32 3328
    %vm47 = vsmask.f32 7440
    %vm48 = vmor %vm46, %vm47
    %v50 = vshrl.u32 %v22, 16
    %v52 = vrot.slane %v50, 4
    %v53 = vshll.u32 %v22, 16
    %v55 = vrot.slane %v53, 5
    %v56 = vor.u32 %v52, %v55
    %v57 = vrot.slane %v56, 4
    %v59 = vshll.u32 %v23, 16
    %v61 = vrot.slane %v59, 5
    %v62 = vsel %vm48, %v57, %v61
    %v63 = vshrl.u32 %v23, 16
    %v65 = vrot.slane %v63, 4
    %v66 = vor.u32 %v65, %v61
    %v67 = vrot.slane %v66, 4
    %v69 = vshll.u32 %v38, 16
    %v71 = vrot.slane %v69, 5
    %v72 = vsel %vm48, %v67, %v71
    %v74 = vshrl.u32 %v24, 16
    %v76 = vrot.slane %v74, 4
    %v77 = vshll.u32 %v24, 16
    %v79 = vrot.slane %v77, 5
    %v80 = vor.u32 %v76, %v79
    %v81 = vrot.slane %v80, 4
    %v83 = vshll.u32 %v25, 16
    %v85 = vrot.slane %v83, 5
    %v86 = vsel %vm48, %v81, %v85
    %v87 = vshrl.u32 %v25, 16
    %v89 = vrot.slane %v87, 4
    %v90 = vor.u32 %v89, %v85
    %v91 = vrot.slane %v90, 4
    %v93 = vshll.u32 %v39, 16
    %v95 = vrot.slane %v93, 5
    %v96 = vsel %vm48, %v91, %v95
    %v98 = vshrl.u32 %v26, 16
    %v100 = vrot.slane %v98, 4
    %v101 = vshll.u32 %v26, 16
    %v103 = vrot.slane %v101, 5
    %v104 = vor.u32 %v100, %v103
    %v105 = vrot.slane %v104, 4
    %v107 = vshll.u32 %v27, 16
    %v109 = vrot.slane %v107, 5
    %v110 = vsel %vm48, %v105, %v109
    %v111 = vshrl.u32 %v27, 16
    %v113 = vrot.slane %v111, 4
    %v114 = vor.u32 %v113, %v109
    %v115 = vrot.slane %v114, 4
    %v117 = vshll.u32 %v40, 16
    %v119 = vrot.slane %v117, 5
    %v120 = vsel %vm48, %v115, %v119
    %v122 = vshrl.u32 %v28, 16
    %v124 = vrot.slane %v122, 4
    %v125 = vshll.u32 %v28, 16
    %v127 = vrot.slane %v125, 5
    %v128 = vor.u32 %v124, %v127
    %v129 = vrot.slane %v128, 4
    %v131 = vshll.u32 %v29, 16
    %v133 = vrot.slane %v131, 5
    %v134 = vsel %vm48, %v129, %v133
    %v135 = vshrl.u32 %v29, 16
    %v137 = vrot.slane %v135, 4
    %v138 = vor.u32 %v137, %v133
    %v139 = vrot.slane %v138, 4
    %v141 = vshll.u32 %v41, 16
    %v143 = vrot.slane %v141, 5
    %v144 = vsel %vm48, %v139, %v143
    %v146 = vshrl.u32 %v30, 16
    %v148 = vrot.slane %v146, 4
    %v149 = vshll.u32 %v30, 16
    %v151 = vrot.slane %v149, 5
    %v152 = vor.u32 %v148, %v151
    %v153 = vrot.slane %v152, 4
    %v155 = vshll.u32 %v31, 16
    %v157 = vrot.slane %v155, 5
    %v158 = vsel %vm48, %v153, %v157
    %v159 = vshrl.u32 %v31, 16
    %v161 = vrot.slane %v159, 4
    %v162 = vor.u32 %v161, %v157
    %v163 = vrot.slane %v162, 4
    %v165 = vshll.u32 %v42, 16
    %v167 = vrot.slane %v165, 5
    %v168 = vsel %vm48, %v163, %v167
    %v170 = vshrl.u32 %v32, 16
    %v172 = vrot.slane %v170, 4
    %v173 = vshll.u32 %v32, 16
    %v175 = vrot.slane %v173, 5
    %v176 = vor.u32 %v172, %v175
    %v177 = vrot.slane %v176, 4
    %v179 = vshll.u32 %v33, 16
    %v181 = vrot.slane %v179, 5
    %v182 = vsel %vm48, %v177, %v181
    %v183 = vshrl.u32 %v33, 16
    %v185 = vrot.slane %v183, 4
    %v186 = vor.u32 %v185, %v181
    %v187 = vrot.slane %v186, 4
    %v189 = vshll.u32 %v43, 16
    %v191 = vrot.slane %v189, 5
    %v192 = vsel %vm48, %v187, %v191
    %v194 = vshrl.u32 %v34, 16
    %v196 = vrot.slane %v194, 4
    %v197 = vshll.u32 %v34, 16
    %v199 = vrot.slane %v197, 5
    %v200 = vor.u32 %v196, %v199
    %v201 = vrot.slane %v200, 4
    %v203 = vshll.u32 %v35, 16
    %v205 = vrot.slane %v203, 5
    %v206 = vsel %vm48, %v201, %v205
    %v207 = vshrl.u32 %v35, 16
    %v209 = vrot.slane %v207, 4
    %v210 = vor.u32 %v209, %v205
    %v211 = vrot.slane %v210, 4
    %v213 = vshll.u32 %v44, 16
    %v215 = vrot.slane %v213, 5
    %v216 = vsel %vm48, %v211, %v215
    %v218 = vshrl.u32 %v36, 16
    %v220 = vrot.slane %v218, 4
    %v221 = vshll.u32 %v36, 16
    %v223 = vrot.slane %v221, 5
    %v224 = vor.u32 %v220, %v223
    %v225 = vrot.slane %v224, 4
    %v227 = vshll.u32 %v37, 16
    %v229 = vrot.slane %v227, 5
    %v230 = vsel %vm48, %v225, %v229
    %v231 = vshrl.u32 %v37, 16
    %v233 = vrot.slane %v231, 4
    %v234 = vor.u32 %v233, %v229
    %v235 = vrot.slane %v234, 4
    %v237 = vshll.u32 %v45, 16
    %v239 = vrot.slane %v237, 5
    %v240 = vsel %vm48, %v235, %v239
    %v241 = vld [vmem:[%s0] sm:$0xe]
    %v242 = vld [vmem:[%s0 + $0xc] sm:$0xe]
    %v243 = vld [vmem:[%s0 + $0x18] sm:$0xe]
    %v244 = vld [vmem:[%s0 + $0x24] sm:$0xe]
    %v245 = vld [vmem:[%s0 + $0x30] sm:$0xe]
    %v246 = vld [vmem:[%s0 + $0x3c] sm:$0xe]
    %v247 = vld [vmem:[%s0 + $0x48] sm:$0xe]
    %v248 = vld [vmem:[%s0 + $0x54] sm:$0xe]
    %vm273 = vcmask 1042432
    %vm274 = vcmask 1046532
    %vm275 = vmor %vm273, %vm274
    %v276 = vrot.slane %v241, 5
    %v277 = vrot.slane %v276, 4
    %v278 = vrot.slane %v23, 5
    %v279 = vsel %vm275, %v277, %v278
    %v280 = vrot.slane %v278, 4
    %v281 = vrot.slane %v38, 5
    %v282 = vsel %vm275, %v280, %v281
    %v283 = vrot.slane %v242, 5
    %v284 = vrot.slane %v283, 4
    %v285 = vrot.slane %v25, 5
    %v286 = vsel %vm275, %v284, %v285
    %v287 = vrot.slane %v285, 4
    %v288 = vrot.slane %v39, 5
    %v289 = vsel %vm275, %v287, %v288
    %v290 = vrot.slane %v243, 5
    %v291 = vrot.slane %v290, 4
    %v292 = vrot.slane %v27, 5
    %v293 = vsel %vm275, %v291, %v292
    %v294 = vrot.slane %v292, 4
    %v295 = vrot.slane %v40, 5
    %v296 = vsel %vm275, %v294, %v295
    %v297 = vrot.slane %v244, 5
    %v298 = vrot.slane %v297, 4
    %v299 = vrot.slane %v29, 5
    %v300 = vsel %vm275, %v298, %v299
    %v301 = vrot.slane %v299, 4
    %v302 = vrot.slane %v41, 5
    %v303 = vsel %vm275, %v301, %v302
    %v304 = vrot.slane %v245, 5
    %v305 = vrot.slane %v304, 4
    %v306 = vrot.slane %v31, 5
    %v307 = vsel %vm275, %v305, %v306
    %v308 = vrot.slane %v306, 4
    %v309 = vrot.slane %v42, 5
    %v310 = vsel %vm275, %v308, %v309
    %v311 = vrot.slane %v246, 5
    %v312 = vrot.slane %v311, 4
    %v313 = vrot.slane %v33, 5
    %v314 = vsel %vm275, %v312, %v313
    %v315 = vrot.slane %v313, 4
    %v316 = vrot.slane %v43, 5
    %v317 = vsel %vm275, %v315, %v316
    %v318 = vrot.slane %v247, 5
    %v319 = vrot.slane %v318, 4
    %v320 = vrot.slane %v35, 5
    %v321 = vsel %vm275, %v319, %v320
    %v322 = vrot.slane %v320, 4
    %v323 = vrot.slane %v44, 5
    %v324 = vsel %vm275, %v322, %v323
    %v325 = vrot.slane %v248, 5
    %v326 = vrot.slane %v325, 4
    %v327 = vrot.slane %v37, 5
    %v328 = vsel %vm275, %v326, %v327
    %v329 = vrot.slane %v327, 4
    %v330 = vrot.slane %v45, 5
    %v331 = vsel %vm275, %v329, %v330
    %v332 = vld [vmem:[%s0 + $0x8] sm:$0x3]
    %v333 = vld [vmem:[%s0 + $0x14] sm:$0x3]
    %v334 = vld [vmem:[%s0 + $0x20] sm:$0x3]
    %v335 = vld [vmem:[%s0 + $0x2c] sm:$0x3]
    %v336 = vld [vmem:[%s0 + $0x38] sm:$0x3]
    %v337 = vld [vmem:[%s0 + $0x44] sm:$0x3]
    %v338 = vld [vmem:[%s0 + $0x50] sm:$0x3]
    %v339 = vld [vmem:[%s0 + $0x5c] sm:$0x3]
    %vm340 = vsmask.f32 2304
    %vm341 = vsmask.f32 6416
    %vm342 = vmor %vm340, %vm341
    %v344 = vshrl.u32 %v241, 16
    %v346 = vrot.slane %v344, 5
    %v347 = vshll.u32 %v241, 16
    %v349 = vrot.slane %v347, 6
    %v350 = vor.u32 %v346, %v349
    %v351 = vrot.slane %v350, 4
    %v352 = vrot.slane %v63, 5
    %v353 = vrot.slane %v59, 6
    %v354 = vor.u32 %v352, %v353
    %v355 = vsel %vm342, %v351, %v354
    %v356 = vrot.slane %v354, 4
    %v358 = vshrl.u32 %v332, 16
    %v360 = vrot.slane %v358, 5
    %v361 = vshll.u32 %v332, 16
    %v363 = vrot.slane %v361, 6
    %v364 = vor.u32 %v360, %v363
    %v365 = vsel %vm342, %v356, %v364
    %v367 = vshrl.u32 %v242, 16
    %v369 = vrot.slane %v367, 5
    %v370 = vshll.u32 %v242, 16
    %v372 = vrot.slane %v370, 6
    %v373 = vor.u32 %v369, %v372
    %v374 = vrot.slane %v373, 4
    %v375 = vrot.slane %v87, 5
    %v376 = vrot.slane %v83, 6
    %v377 = vor.u32 %v375, %v376
    %v378 = vsel %vm342, %v374, %v377
    %v379 = vrot.slane %v377, 4
    %v381 = vshrl.u32 %v333, 16
    %v383 = vrot.slane %v381, 5
    %v384 = vshll.u32 %v333, 16
    %v386 = vrot.slane %v384, 6
    %v387 = vor.u32 %v383, %v386
    %v388 = vsel %vm342, %v379, %v387
    %v390 = vshrl.u32 %v243, 16
    %v392 = vrot.slane %v390, 5
    %v393 = vshll.u32 %v243, 16
    %v395 = vrot.slane %v393, 6
    %v396 = vor.u32 %v392, %v395
    %v397 = vrot.slane %v396, 4
    %v398 = vrot.slane %v111, 5
    %v399 = vrot.slane %v107, 6
    %v400 = vor.u32 %v398, %v399
    %v401 = vsel %vm342, %v397, %v400
    %v402 = vrot.slane %v400, 4
    %v404 = vshrl.u32 %v334, 16
    %v406 = vrot.slane %v404, 5
    %v407 = vshll.u32 %v334, 16
    %v409 = vrot.slane %v407, 6
    %v410 = vor.u32 %v406, %v409
    %v411 = vsel %vm342, %v402, %v410
    %v413 = vshrl.u32 %v244, 16
    %v415 = vrot.slane %v413, 5
    %v416 = vshll.u32 %v244, 16
    %v418 = vrot.slane %v416, 6
    %v419 = vor.u32 %v415, %v418
    %v420 = vrot.slane %v419, 4
    %v421 = vrot.slane %v135, 5
    %v422 = vrot.slane %v131, 6
    %v423 = vor.u32 %v421, %v422
    %v424 = vsel %vm342, %v420, %v423
    %v425 = vrot.slane %v423, 4
    %v427 = vshrl.u32 %v335, 16
    %v429 = vrot.slane %v427, 5
    %v430 = vshll.u32 %v335, 16
    %v432 = vrot.slane %v430, 6
    %v433 = vor.u32 %v429, %v432
    %v434 = vsel %vm342, %v425, %v433
    %v436 = vshrl.u32 %v245, 16
    %v438 = vrot.slane %v436, 5
    %v439 = vshll.u32 %v245, 16
    %v441 = vrot.slane %v439, 6
    %v442 = vor.u32 %v438, %v441
    %v443 = vrot.slane %v442, 4
    %v444 = vrot.slane %v159, 5
    %v445 = vrot.slane %v155, 6
    %v446 = vor.u32 %v444, %v445
    %v447 = vsel %vm342, %v443, %v446
    %v448 = vrot.slane %v446, 4
    %v450 = vshrl.u32 %v336, 16
    %v452 = vrot.slane %v450, 5
    %v453 = vshll.u32 %v336, 16
    %v455 = vrot.slane %v453, 6
    %v456 = vor.u32 %v452, %v455
    %v457 = vsel %vm342, %v448, %v456
    %v459 = vshrl.u32 %v246, 16
    %v461 = vrot.slane %v459, 5
    %v462 = vshll.u32 %v246, 16
    %v464 = vrot.slane %v462, 6
    %v465 = vor.u32 %v461, %v464
    %v466 = vrot.slane %v465, 4
    %v467 = vrot.slane %v183, 5
    %v468 = vrot.slane %v179, 6
    %v469 = vor.u32 %v467, %v468
    %v470 = vsel %vm342, %v466, %v469
    %v471 = vrot.slane %v469, 4
    %v473 = vshrl.u32 %v337, 16
    %v475 = vrot.slane %v473, 5
    %v476 = vshll.u32 %v337, 16
    %v478 = vrot.slane %v476, 6
    %v479 = vor.u32 %v475, %v478
    %v480 = vsel %vm342, %v471, %v479
    %v482 = vshrl.u32 %v247, 16
    %v484 = vrot.slane %v482, 5
    %v485 = vshll.u32 %v247, 16
    %v487 = vrot.slane %v485, 6
    %v488 = vor.u32 %v484, %v487
    %v489 = vrot.slane %v488, 4
    %v490 = vrot.slane %v207, 5
    %v491 = vrot.slane %v203, 6
    %v492 = vor.u32 %v490, %v491
    %v493 = vsel %vm342, %v489, %v492
    %v494 = vrot.slane %v492, 4
    %v496 = vshrl.u32 %v338, 16
    %v498 = vrot.slane %v496, 5
    %v499 = vshll.u32 %v338, 16
    %v501 = vrot.slane %v499, 6
    %v502 = vor.u32 %v498, %v501
    %v503 = vsel %vm342, %v494, %v502
    %v505 = vshrl.u32 %v248, 16
    %v507 = vrot.slane %v505, 5
    %v508 = vshll.u32 %v248, 16
    %v510 = vrot.slane %v508, 6
    %v511 = vor.u32 %v507, %v510
    %v512 = vrot.slane %v511, 4
    %v513 = vrot.slane %v231, 5
    %v514 = vrot.slane %v227, 6
    %v515 = vor.u32 %v513, %v514
    %v516 = vsel %vm342, %v512, %v515
    %v517 = vrot.slane %v515, 4
    %v519 = vshrl.u32 %v339, 16
    %v521 = vrot.slane %v519, 5
    %v522 = vshll.u32 %v339, 16
    %v524 = vrot.slane %v522, 6
    %v525 = vor.u32 %v521, %v524
    %v526 = vsel %vm342, %v517, %v525
    %v527 = vld [vmem:[%s0] sm:$0xc]
    %v528 = vld [vmem:[%s0 + $0xc] sm:$0xc]
    %v529 = vld [vmem:[%s0 + $0x18] sm:$0xc]
    %v530 = vld [vmem:[%s0 + $0x24] sm:$0xc]
    %v531 = vld [vmem:[%s0 + $0x30] sm:$0xc]
    %v532 = vld [vmem:[%s0 + $0x3c] sm:$0xc]
    %v533 = vld [vmem:[%s0 + $0x48] sm:$0xc]
    %v534 = vld [vmem:[%s0 + $0x54] sm:$0xc]
    %vm551 = vcmask 1041408
    %vm552 = vcmask 1045508
    %vm553 = vmor %vm551, %vm552
    %v554 = vrot.slane %v527, 6
    %v555 = vrot.slane %v554, 4
    %v556 = vrot.slane %v23, 6
    %v557 = vsel %vm553, %v555, %v556
    %v558 = vrot.slane %v556, 4
    %v559 = vrot.slane %v332, 6
    %v560 = vsel %vm553, %v558, %v559
    %v561 = vrot.slane %v528, 6
    %v562 = vrot.slane %v561, 4
    %v563 = vrot.slane %v25, 6
    %v564 = vsel %vm553, %v562, %v563
    %v565 = vrot.slane %v563, 4
    %v566 = vrot.slane %v333, 6
    %v567 = vsel %vm553, %v565, %v566
    %v568 = vrot.slane %v529, 6
    %v569 = vrot.slane %v568, 4
    %v570 = vrot.slane %v27, 6
    %v571 = vsel %vm553, %v569, %v570
    %v572 = vrot.slane %v570, 4
    %v573 = vrot.slane %v334, 6
    %v574 = vsel %vm553, %v572, %v573
    %v575 = vrot.slane %v530, 6
    %v576 = vrot.slane %v575, 4
    %v577 = vrot.slane %v29, 6
    %v578 = vsel %vm553, %v576, %v577
    %v579 = vrot.slane %v577, 4
    %v580 = vrot.slane %v335, 6
    %v581 = vsel %vm553, %v579, %v580
    %v582 = vrot.slane %v531, 6
    %v583 = vrot.slane %v582, 4
    %v584 = vrot.slane %v31, 6
    %v585 = vsel %vm553, %v583, %v584
    %v586 = vrot.slane %v584, 4
    %v587 = vrot.slane %v336, 6
    %v588 = vsel %vm553, %v586, %v587
    %v589 = vrot.slane %v532, 6
    %v590 = vrot.slane %v589, 4
    %v591 = vrot.slane %v33, 6
    %v592 = vsel %vm553, %v590, %v591
    %v593 = vrot.slane %v591, 4
    %v594 = vrot.slane %v337, 6
    %v595 = vsel %vm553, %v593, %v594
    %v596 = vrot.slane %v533, 6
    %v597 = vrot.slane %v596, 4
    %v598 = vrot.slane %v35, 6
    %v599 = vsel %vm553, %v597, %v598
    %v600 = vrot.slane %v598, 4
    %v601 = vrot.slane %v338, 6
    %v602 = vsel %vm553, %v600, %v601
    %v603 = vrot.slane %v534, 6
    %v604 = vrot.slane %v603, 4
    %v605 = vrot.slane %v37, 6
    %v606 = vsel %vm553, %v604, %v605
    %v607 = vrot.slane %v605, 4
    %v608 = vrot.slane %v339, 6
    %v609 = vsel %vm553, %v607, %v608
    %v618 = vunpack.c.l.b16 %v22
    %v619 = vunpack.c.l.b16 %v23
    %v620 = vunpack.c.l.b16 %v24
    %v621 = vunpack.c.l.b16 %v25
    %v622 = vunpack.c.l.b16 %v26
    %v623 = vunpack.c.l.b16 %v27
    %v624 = vunpack.c.l.b16 %v28
    %v625 = vunpack.c.l.b16 %v29
    %v626 = vunpack.c.l.b16 %v30
    %v627 = vunpack.c.l.b16 %v31
    %v628 = vunpack.c.l.b16 %v32
    %v629 = vunpack.c.l.b16 %v33
    %v630 = vunpack.c.l.b16 %v34
    %v631 = vunpack.c.l.b16 %v35
    %v632 = vunpack.c.l.b16 %v36
    %v633 = vunpack.c.l.b16 %v37
    %v634 = vpack.c.b16 %v619, %v618
    %v635 = vpack.c.b16 %v621, %v620
    %v636 = vpack.c.b16 %v623, %v622
    %v637 = vpack.c.b16 %v625, %v624
    %v638 = vpack.c.b16 %v627, %v626
    %v639 = vpack.c.b16 %v629, %v628
    %v640 = vpack.c.b16 %v631, %v630
    %v641 = vpack.c.b16 %v633, %v632
    %v642 = vunpack.c.l.b16 %v62
    %v643 = vunpack.c.l.b16 %v72
    %v644 = vunpack.c.l.b16 %v86
    %v645 = vunpack.c.l.b16 %v96
    %v646 = vunpack.c.l.b16 %v110
    %v647 = vunpack.c.l.b16 %v120
    %v648 = vunpack.c.l.b16 %v134
    %v649 = vunpack.c.l.b16 %v144
    %v650 = vunpack.c.l.b16 %v158
    %v651 = vunpack.c.l.b16 %v168
    %v652 = vunpack.c.l.b16 %v182
    %v653 = vunpack.c.l.b16 %v192
    %v654 = vunpack.c.l.b16 %v206
    %v655 = vunpack.c.l.b16 %v216
    %v656 = vunpack.c.l.b16 %v230
    %v657 = vunpack.c.l.b16 %v240
    %v658 = vpack.c.b16 %v643, %v642
    %v659 = vpack.c.b16 %v645, %v644
    %v660 = vpack.c.b16 %v647, %v646
    %v661 = vpack.c.b16 %v649, %v648
    %v662 = vpack.c.b16 %v651, %v650
    %v663 = vpack.c.b16 %v653, %v652
    %v664 = vpack.c.b16 %v655, %v654
    %v665 = vpack.c.b16 %v657, %v656
    %666 = vrot.lane.b32.xlu0 %v658, 32
    %v667 = vpop.permute.xlu0 %666
    %668 = vrot.lane.b32.xlu0 %v659, 32
    %v669 = vpop.permute.xlu0 %668
    %670 = vrot.lane.b32.xlu0 %v660, 32
    %v671 = vpop.permute.xlu0 %670
    %672 = vrot.lane.b32.xlu0 %v661, 32
    %v673 = vpop.permute.xlu0 %672
    %674 = vrot.lane.b32.xlu0 %v662, 32
    %v675 = vpop.permute.xlu0 %674
    %676 = vrot.lane.b32.xlu0 %v663, 32
    %v677 = vpop.permute.xlu0 %676
    %678 = vrot.lane.b32.xlu0 %v664, 32
    %v679 = vpop.permute.xlu0 %678
    %680 = vrot.lane.b32.xlu0 %v665, 32
    %v681 = vpop.permute.xlu0 %680
    %v682 = vunpack.c.l.b16 %v279
    %v683 = vunpack.c.l.b16 %v282
    %v684 = vunpack.c.l.b16 %v286
    %v685 = vunpack.c.l.b16 %v289
    %v686 = vunpack.c.l.b16 %v293
    %v687 = vunpack.c.l.b16 %v296
    %v688 = vunpack.c.l.b16 %v300
    %v689 = vunpack.c.l.b16 %v303
    %v690 = vunpack.c.l.b16 %v307
    %v691 = vunpack.c.l.b16 %v310
    %v692 = vunpack.c.l.b16 %v314
    %v693 = vunpack.c.l.b16 %v317
    %v694 = vunpack.c.l.b16 %v321
    %v695 = vunpack.c.l.b16 %v324
    %v696 = vunpack.c.l.b16 %v328
    %v697 = vunpack.c.l.b16 %v331
    %v698 = vpack.c.b16 %v683, %v682
    %v699 = vpack.c.b16 %v685, %v684
    %v700 = vpack.c.b16 %v687, %v686
    %v701 = vpack.c.b16 %v689, %v688
    %v702 = vpack.c.b16 %v691, %v690
    %v703 = vpack.c.b16 %v693, %v692
    %v704 = vpack.c.b16 %v695, %v694
    %v705 = vpack.c.b16 %v697, %v696
    %706 = vrot.lane.b32.xlu0 %v698, 64
    %v707 = vpop.permute.xlu0 %706
    %708 = vrot.lane.b32.xlu0 %v699, 64
    %v709 = vpop.permute.xlu0 %708
    %710 = vrot.lane.b32.xlu0 %v700, 64
    %v711 = vpop.permute.xlu0 %710
    %712 = vrot.lane.b32.xlu0 %v701, 64
    %v713 = vpop.permute.xlu0 %712
    %714 = vrot.lane.b32.xlu0 %v702, 64
    %v715 = vpop.permute.xlu0 %714
    %716 = vrot.lane.b32.xlu0 %v703, 64
    %v717 = vpop.permute.xlu0 %716
    %718 = vrot.lane.b32.xlu0 %v704, 64
    %v719 = vpop.permute.xlu0 %718
    %720 = vrot.lane.b32.xlu0 %v705, 64
    %v721 = vpop.permute.xlu0 %720
    %v722 = vunpack.c.l.b16 %v355
    %v723 = vunpack.c.l.b16 %v365
    %v724 = vunpack.c.l.b16 %v378
    %v725 = vunpack.c.l.b16 %v388
    %v726 = vunpack.c.l.b16 %v401
    %v727 = vunpack.c.l.b16 %v411
    %v728 = vunpack.c.l.b16 %v424
    %v729 = vunpack.c.l.b16 %v434
    %v730 = vunpack.c.l.b16 %v447
    %v731 = vunpack.c.l.b16 %v457
    %v732 = vunpack.c.l.b16 %v470
    %v733 = vunpack.c.l.b16 %v480
    %v734 = vunpack.c.l.b16 %v493
    %v735 = vunpack.c.l.b16 %v503
    %v736 = vunpack.c.l.b16 %v516
    %v737 = vunpack.c.l.b16 %v526
    %v738 = vpack.c.b16 %v723, %v722
    %v739 = vpack.c.b16 %v725, %v724
    %v740 = vpack.c.b16 %v727, %v726
    %v741 = vpack.c.b16 %v729, %v728
    %v742 = vpack.c.b16 %v731, %v730
    %v743 = vpack.c.b16 %v733, %v732
    %v744 = vpack.c.b16 %v735, %v734
    %v745 = vpack.c.b16 %v737, %v736
    %746 = vrot.lane.b32.xlu0 %v738, 96
    %v747 = vpop.permute.xlu0 %746
    %748 = vrot.lane.b32.xlu0 %v739, 96
    %v749 = vpop.permute.xlu0 %748
    %750 = vrot.lane.b32.xlu0 %v740, 96
    %v751 = vpop.permute.xlu0 %750
    %752 = vrot.lane.b32.xlu0 %v741, 96
    %v753 = vpop.permute.xlu0 %752
    %754 = vrot.lane.b32.xlu0 %v742, 96
    %v755 = vpop.permute.xlu0 %754
    %756 = vrot.lane.b32.xlu0 %v743, 96
    %v757 = vpop.permute.xlu0 %756
    %758 = vrot.lane.b32.xlu0 %v744, 96
    %v759 = vpop.permute.xlu0 %758
    %760 = vrot.lane.b32.xlu0 %v745, 96
    %v761 = vpop.permute.xlu0 %760
    %v762 = vunpack.c.l.b16 %v557
    %v763 = vunpack.c.l.b16 %v560
    %v764 = vunpack.c.l.b16 %v564
    %v765 = vunpack.c.l.b16 %v567
    %v766 = vunpack.c.l.b16 %v571
    %v767 = vunpack.c.l.b16 %v574
    %v768 = vunpack.c.l.b16 %v578
    %v769 = vunpack.c.l.b16 %v581
    %v770 = vunpack.c.l.b16 %v585
    %v771 = vunpack.c.l.b16 %v588
    %v772 = vunpack.c.l.b16 %v592
    %v773 = vunpack.c.l.b16 %v595
    %v774 = vunpack.c.l.b16 %v599
    %v775 = vunpack.c.l.b16 %v602
    %v776 = vunpack.c.l.b16 %v606
    %v777 = vunpack.c.l.b16 %v609
    %v778 = vpack.c.b16 %v763, %v762
    %v779 = vpack.c.b16 %v765, %v764
    %v780 = vpack.c.b16 %v767, %v766
    %v781 = vpack.c.b16 %v769, %v768
    %v782 = vpack.c.b16 %v771, %v770
    %v783 = vpack.c.b16 %v773, %v772
    %v784 = vpack.c.b16 %v775, %v774
    %v785 = vpack.c.b16 %v777, %v776
    %vm786 = vcmask 261120
    %v789 = vsel %vm786, %v634, %v667
    %v792 = vsel %vm786, %v635, %v669
    %v795 = vsel %vm786, %v636, %v671
    %v798 = vsel %vm786, %v637, %v673
    %v801 = vsel %vm786, %v638, %v675
    %v804 = vsel %vm786, %v639, %v677
    %v807 = vsel %vm786, %v640, %v679
    %v810 = vsel %vm786, %v641, %v681
    %vm811 = vcmask 523264
    %v813 = vsel %vm811, %v789, %v707
    %v815 = vsel %vm811, %v792, %v709
    %v817 = vsel %vm811, %v795, %v711
    %v819 = vsel %vm811, %v798, %v713
    %v821 = vsel %vm811, %v801, %v715
    %v823 = vsel %vm811, %v804, %v717
    %v825 = vsel %vm811, %v807, %v719
    %v827 = vsel %vm811, %v810, %v721
    %vm828 = vcmask 785408
    %v830 = vsel %vm828, %v813, %v747
    %v833 = vsel %vm828, %v815, %v749
    %v836 = vsel %vm828, %v817, %v751
    %v839 = vsel %vm828, %v819, %v753
    %v842 = vsel %vm828, %v821, %v755
    %v845 = vsel %vm828, %v823, %v757
    %v848 = vsel %vm828, %v825, %v759
    %v851 = vsel %vm828, %v827, %v761
    %v853 = vld [vmem:[%s1] sm:$0xf]
    %v854 = vld [vmem:[%s1 + $0x4] sm:$0xf]
    %v855 = vld [vmem:[%s1 + $0x8] sm:$0xf]
    %v856 = vld [vmem:[%s1 + $0xc] sm:$0xf]
    %v857 = vld [vmem:[%s1 + $0x10] sm:$0xf]
    %v858 = vld [vmem:[%s1 + $0x14] sm:$0xf]
    %v859 = vld [vmem:[%s1 + $0x18] sm:$0xf]
    %v860 = vld [vmem:[%s1 + $0x1c] sm:$0xf]
    %v861 = vld [vmem:[%s1 + $0x20] sm:$0xf]
    %v862 = vld [vmem:[%s1 + $0x24] sm:$0xf]
    %v863 = vld [vmem:[%s1 + $0x28] sm:$0xf]
    %v864 = vld [vmem:[%s1 + $0x2c] sm:$0xf]
    %v865 = vld [vmem:[%s1 + $0x30] sm:$0xf]
    %v866 = vld [vmem:[%s1 + $0x34] sm:$0xf]
    %v867 = vld [vmem:[%s1 + $0x38] sm:$0xf]
    %v868 = vld [vmem:[%s1 + $0x3c] sm:$0xf]
    %v869 = vld [vmem:[%s1 + $0x40] sm:$0xf]
    %v870 = vld [vmem:[%s1 + $0x44] sm:$0xf]
    %v871 = vld [vmem:[%s1 + $0x48] sm:$0xf]
    %v872 = vld [vmem:[%s1 + $0x4c] sm:$0xf]
    %v893 = vunpack.c.l.b16 %v853
    %v894 = vunpack.c.l.b16 %v854
    %v895 = vunpack.c.l.b16 %v855
    %v896 = vunpack.c.l.b16 %v856
    %v897 = vunpack.c.l.b16 %v857
    %v898 = vunpack.c.l.b16 %v858
    %v899 = vunpack.c.l.b16 %v859
    %v900 = vunpack.c.l.b16 %v860
    %v901 = vunpack.c.l.b16 %v861
    %v902 = vunpack.c.l.b16 %v862
    %v903 = vunpack.c.l.b16 %v863
    %v904 = vunpack.c.l.b16 %v864
    %v905 = vunpack.c.l.b16 %v865
    %v906 = vunpack.c.l.b16 %v866
    %v907 = vunpack.c.l.b16 %v867
    %v908 = vunpack.c.l.b16 %v868
    %v909 = vunpack.c.l.b16 %v869
    %v910 = vunpack.c.l.b16 %v870
    %v911 = vunpack.c.l.b16 %v871
    %v912 = vunpack.c.l.b16 %v872
    %v913 = vpack.c.b16 %v894, %v893
    %v914 = vpack.c.b16 %v896, %v895
    %v915 = vpack.c.b16 %v898, %v897
    %v916 = vpack.c.b16 %v900, %v899
    %v917 = vpack.c.b16 %v902, %v901
    %v918 = vpack.c.b16 %v904, %v903
    %v919 = vpack.c.b16 %v906, %v905
    %v920 = vpack.c.b16 %v908, %v907
    %v921 = vpack.c.b16 %v910, %v909
    %v922 = vpack.c.b16 %v912, %v911
    %v934 = vsel %vm786, %v778, 0
    %v937 = vsel %vm786, %v779, 0
    %v940 = vsel %vm786, %v780, 0
    %v943 = vsel %vm786, %v781, 0
    %v946 = vsel %vm786, %v782, 0
    %v949 = vsel %vm786, %v783, 0
    %v952 = vsel %vm786, %v784, 0
    %v955 = vsel %vm786, %v785, 0
    %957 = vmatprep.subr.bf16.mxu0 0
    %958 = vmatpush1.bf16.msra.mxu0 %v920
    %959 = vmatprep.subr.bf16.mxu0 0
    %960 = vmatpush1.bf16.msra.mxu0 %v919
    %961 = vmatprep.subr.bf16.mxu0 0
    %962 = vmatpush1.bf16.msra.mxu0 %v918
    %963 = vmatprep.subr.bf16.mxu0 0
    %964 = vmatpush1.bf16.msra.mxu0 %v917
    %965 = vmatprep.subr.bf16.mxu0 0
    %966 = vmatpush1.bf16.msra.mxu0 %v916
    %967 = vmatprep.subr.bf16.mxu0 0
    %968 = vmatpush1.bf16.msra.mxu0 %v915
    %969 = vmatprep.subr.bf16.mxu0 0
    %970 = vmatpush1.bf16.msra.mxu0 %v914
    %971 = vmatprep.subr.bf16.mxu0 0
    %972 = vmatpush1.bf16.msra.mxu0 %v913
    %973 = vmatprep.subr.bf16.mxu0 0
    %974 = vmatpush2.bf16.msra.mxu0 0
    %975 = vmatprep.subr.bf16.mxu0 0
    %976 = vmatpush2.bf16.msra.mxu0 0
    %977 = vmatprep.subr.bf16.mxu0 0
    %978 = vmatpush2.bf16.msra.mxu0 0
    %979 = vmatprep.subr.bf16.mxu0 0
    %980 = vmatpush2.bf16.msra.mxu0 0
    %981 = vmatprep.subr.bf16.mxu0 0
    %982 = vmatpush2.bf16.msra.mxu0 0
    %983 = vmatprep.subr.bf16.mxu0 0
    %984 = vmatpush2.bf16.msra.mxu0 0
    %985 = vmatprep.subr.bf16.mxu0 0
    %986 = vmatpush2.bf16.msra.mxu0 %v922
    %987 = vmatprep.subr.bf16.mxu0 0
    %988 = vmatpush2.bf16.msra.mxu0 %v921
    %989 = vmatprep.mubr.bf16.mxu0 %v934
    %990 = vmatmul.mubr.bf16.gmra.mxu0 %v830
    %v991 = vpop.f32.mrf.mxu0
    %v992 = vadd.f32 0.0, %v991
    %v993 = vpop.f32.mrf.mxu0
    %v994 = vpop.f32.mrf.mxu0
    %v995 = vadd.f32 0.0, %v994
    %v996 = vpop.f32.mrf.mxu0
    %997 = vmatprep.mubr.bf16.mxu0 %v937
    %998 = vmatmul.mubr.bf16.gmra.mxu0 %v833
    %v999 = vpop.f32.mrf.mxu0
    %v1000 = vadd.f32 0.0, %v999
    %v1001 = vpop.f32.mrf.mxu0
    %v1002 = vpop.f32.mrf.mxu0
    %v1003 = vadd.f32 0.0, %v1002
    %v1004 = vpop.f32.mrf.mxu0
    %1005 = vmatprep.mubr.bf16.mxu0 %v940
    %1006 = vmatmul.mubr.bf16.gmra.mxu0 %v836
    %v1007 = vpop.f32.mrf.mxu0
    %v1008 = vadd.f32 0.0, %v1007
    %v1009 = vpop.f32.mrf.mxu0
    %v1010 = vpop.f32.mrf.mxu0
    %v1011 = vadd.f32 0.0, %v1010
    %v1012 = vpop.f32.mrf.mxu0
    %1013 = vmatprep.mubr.bf16.mxu0 %v943
    %1014 = vmatmul.mubr.bf16.gmra.mxu0 %v839
    %v1015 = vpop.f32.mrf.mxu0
    %v1016 = vadd.f32 0.0, %v1015
    %v1017 = vpop.f32.mrf.mxu0
    %v1018 = vpop.f32.mrf.mxu0
    %v1019 = vadd.f32 0.0, %v1018
    %v1020 = vpop.f32.mrf.mxu0
    %1021 = vmatprep.mubr.bf16.mxu0 %v946
    %1022 = vmatmul.mubr.bf16.gmra.mxu0 %v842
    %v1023 = vpop.f32.mrf.mxu0
    %v1024 = vadd.f32 0.0, %v1023
    %v1025 = vpop.f32.mrf.mxu0
    %v1026 = vpop.f32.mrf.mxu0
    %v1027 = vadd.f32 0.0, %v1026
    %v1028 = vpop.f32.mrf.mxu0
    %1029 = vmatprep.mubr.bf16.mxu0 %v949
    %1030 = vmatmul.mubr.bf16.gmra.mxu0 %v845
    %v1031 = vpop.f32.mrf.mxu0
    %v1032 = vadd.f32 0.0, %v1031
    %v1033 = vpop.f32.mrf.mxu0
    %v1034 = vpop.f32.mrf.mxu0
    %v1035 = vadd.f32 0.0, %v1034
    %v1036 = vpop.f32.mrf.mxu0
    %1037 = vmatprep.mubr.bf16.mxu0 %v952
    %1038 = vmatmul.mubr.bf16.gmra.mxu0 %v848
    %v1039 = vpop.f32.mrf.mxu0
    %v1040 = vadd.f32 0.0, %v1039
    %v1041 = vpop.f32.mrf.mxu0
    %v1042 = vpop.f32.mrf.mxu0
    %v1043 = vadd.f32 0.0, %v1042
    %v1044 = vpop.f32.mrf.mxu0
    %1045 = vmatprep.mubr.bf16.mxu0 %v955
    %1046 = vmatmul.mubr.bf16.gmra.mxu0 %v851
    %v1047 = vpop.f32.mrf.mxu0
    %v1048 = vadd.f32 0.0, %v1047
    %v1049 = vpop.f32.mrf.mxu0
    %v1050 = vpop.f32.mrf.mxu0
    %v1051 = vadd.f32 0.0, %v1050
    %v1052 = vpop.f32.mrf.mxu0
    %1053 = vdwg.mxu0
    %v1054 = vld [vmem:[%s2] sm:$0xff]
    %v1055 = vld [vmem:[%s2 + $0x8] sm:$0xff]
    %v1056 = vadd.f32 %v992, %v1054
    %v1057 = vadd.f32 %v995, %v1055
    %v1058 = vadd.f32 %v1000, %v1054
    %v1059 = vadd.f32 %v1003, %v1055
    %v1060 = vadd.f32 %v1008, %v1054
    %v1061 = vadd.f32 %v1011, %v1055
    %v1062 = vadd.f32 %v1016, %v1054
    %v1063 = vadd.f32 %v1019, %v1055
    %v1064 = vadd.f32 %v1024, %v1054
    %v1065 = vadd.f32 %v1027, %v1055
    %v1066 = vadd.f32 %v1032, %v1054
    %v1067 = vadd.f32 %v1035, %v1055
    %v1068 = vadd.f32 %v1040, %v1054
    %v1069 = vadd.f32 %v1043, %v1055
    %v1070 = vadd.f32 %v1048, %v1054
    %v1071 = vadd.f32 %v1051, %v1055
    %v1072 = vmax.f32 %v1056, %v1057
    %v1073 = vrot.slane %v1072, 4
    %v1074 = vmax.f32 %v1072, %v1073
    %v1075 = vrot.slane %v1074, 2
    %v1076 = vmax.f32 %v1074, %v1075
    %v1077 = vrot.slane %v1076, 1
    %v1078 = vmax.f32 %v1076, %v1077
    %v1079 = vmax.f32 %v1058, %v1059
    %v1080 = vrot.slane %v1079, 4
    %v1081 = vmax.f32 %v1079, %v1080
    %v1082 = vrot.slane %v1081, 2
    %v1083 = vmax.f32 %v1081, %v1082
    %v1084 = vrot.slane %v1083, 1
    %v1085 = vmax.f32 %v1083, %v1084
    %v1086 = vmax.f32 %v1060, %v1061
    %v1087 = vrot.slane %v1086, 4
    %v1088 = vmax.f32 %v1086, %v1087
    %v1089 = vrot.slane %v1088, 2
    %v1090 = vmax.f32 %v1088, %v1089
    %v1091 = vrot.slane %v1090, 1
    %v1092 = vmax.f32 %v1090, %v1091
    %v1093 = vmax.f32 %v1062, %v1063
    %v1094 = vrot.slane %v1093, 4
    %v1095 = vmax.f32 %v1093, %v1094
    %v1096 = vrot.slane %v1095, 2
    %v1097 = vmax.f32 %v1095, %v1096
    %v1098 = vrot.slane %v1097, 1
    %v1099 = vmax.f32 %v1097, %v1098
    %v1100 = vmax.f32 %v1064, %v1065
    %v1101 = vrot.slane %v1100, 4
    %v1102 = vmax.f32 %v1100, %v1101
    %v1103 = vrot.slane %v1102, 2
    %v1104 = vmax.f32 %v1102, %v1103
    %v1105 = vrot.slane %v1104, 1
    %v1106 = vmax.f32 %v1104, %v1105
    %v1107 = vmax.f32 %v1066, %v1067
    %v1108 = vrot.slane %v1107, 4
    %v1109 = vmax.f32 %v1107, %v1108
    %v1110 = vrot.slane %v1109, 2
    %v1111 = vmax.f32 %v1109, %v1110
    %v1112 = vrot.slane %v1111, 1
    %v1113 = vmax.f32 %v1111, %v1112
    %v1114 = vmax.f32 %v1068, %v1069
    %v1115 = vrot.slane %v1114, 4
    %v1116 = vmax.f32 %v1114, %v1115
    %v1117 = vrot.slane %v1116, 2
    %v1118 = vmax.f32 %v1116, %v1117
    %v1119 = vrot.slane %v1118, 1
    %v1120 = vmax.f32 %v1118, %v1119
    %v1121 = vmax.f32 %v1070, %v1071
    %v1122 = vrot.slane %v1121, 4
    %v1123 = vmax.f32 %v1121, %v1122
    %v1124 = vrot.slane %v1123, 2
    %v1125 = vmax.f32 %v1123, %v1124
    %v1126 = vrot.slane %v1125, 1
    %v1127 = vmax.f32 %v1125, %v1126
    %v1128 = vmax.f32 %v1078, 0.0
    %v1129 = vmax.f32 %v1085, 0.0
    %v1130 = vmax.f32 %v1092, 0.0
    %v1131 = vmax.f32 %v1099, 0.0
    %v1132 = vmax.f32 %v1106, 0.0
    %v1133 = vmax.f32 %v1113, 0.0
    %v1134 = vmax.f32 %v1120, 0.0
    %v1135 = vmax.f32 %v1127, 0.0
    %v1136 = vpack.c.bf16 %v1128, %v1128
    %v1137 = vpack.c.bf16 %v1129, %v1129
    %v1138 = vpack.c.bf16 %v1130, %v1130
    %v1139 = vpack.c.bf16 %v1131, %v1131
    %v1140 = vpack.c.bf16 %v1132, %v1132
    %v1141 = vpack.c.bf16 %v1133, %v1133
    %v1142 = vpack.c.bf16 %v1134, %v1134
    %v1143 = vpack.c.bf16 %v1135, %v1135
    %v1144 = vld [vmem:[%s3] sm:$0xf]
    %v1145 = vld [vmem:[%s3 + $0x4] sm:$0xf]
    %v1146 = vld [vmem:[%s3 + $0x8] sm:$0xf]
    %v1147 = vld [vmem:[%s3 + $0xc] sm:$0xf]
    %v1148 = vld [vmem:[%s3 + $0x10] sm:$0xf]
    %v1149 = vld [vmem:[%s3 + $0x14] sm:$0xf]
    %v1150 = vld [vmem:[%s3 + $0x18] sm:$0xf]
    %v1151 = vld [vmem:[%s3 + $0x1c] sm:$0xf]
    %v1152 = vld [vmem:[%s3 + $0x20] sm:$0xf]
    %v1153 = vld [vmem:[%s3 + $0x24] sm:$0xf]
    %v1154 = vld [vmem:[%s3 + $0x28] sm:$0xf]
    %v1155 = vld [vmem:[%s3 + $0x2c] sm:$0xf]
    %v1156 = vld [vmem:[%s3 + $0x30] sm:$0xf]
    %v1157 = vld [vmem:[%s3 + $0x34] sm:$0xf]
    %v1158 = vld [vmem:[%s3 + $0x38] sm:$0xf]
    %v1159 = vld [vmem:[%s3 + $0x3c] sm:$0xf]
    %v1160 = vld [vmem:[%s4] sm:$0x1]
    %v1162 = vlaneseq
    %v1163 = vshrl.u32 %v1162, 7
    %v1164 = vsub.s32 0, %v1163
    %v1165 = vrot.slane %v1160, %v1164
    %v1175 = vunpack.c.l.b16 %v1136
    %v1176 = vunpack.c.l.b16 %v1137
    %v1177 = vunpack.c.l.b16 %v1138
    %v1178 = vunpack.c.l.b16 %v1139
    %v1179 = vunpack.c.l.b16 %v1140
    %v1180 = vunpack.c.l.b16 %v1141
    %v1181 = vunpack.c.l.b16 %v1142
    %v1182 = vunpack.c.l.b16 %v1143
    %vm1183 = vcmask 1041409
    %v1184 = vsel %vm1183, %v1176, %v1175
    %vm1185 = vcmask 1042434
    %v1186 = vsel %vm1185, %v1177, %v1184
    %vm1187 = vcmask 1043459
    %v1188 = vsel %vm1187, %v1178, %v1186
    %vm1189 = vcmask 1044484
    %v1190 = vsel %vm1189, %v1179, %v1188
    %vm1191 = vcmask 1045509
    %v1192 = vsel %vm1191, %v1180, %v1190
    %vm1193 = vcmask 1046534
    %v1194 = vsel %vm1193, %v1181, %v1192
    %vm1195 = vcmask 1047559
    %v1196 = vsel %vm1195, %v1182, %v1194
    %v1197 = vpack.c.b16 %v1196, %v1196
    %v1215 = vunpack.c.l.b16 %v1144
    %v1216 = vunpack.c.l.b16 %v1145
    %v1217 = vunpack.c.l.b16 %v1146
    %v1218 = vunpack.c.l.b16 %v1147
    %v1219 = vunpack.c.l.b16 %v1148
    %v1220 = vunpack.c.l.b16 %v1149
    %v1221 = vunpack.c.l.b16 %v1150
    %v1222 = vunpack.c.l.b16 %v1151
    %v1223 = vunpack.c.l.b16 %v1152
    %v1224 = vunpack.c.l.b16 %v1153
    %v1225 = vunpack.c.l.b16 %v1154
    %v1226 = vunpack.c.l.b16 %v1155
    %v1227 = vunpack.c.l.b16 %v1156
    %v1228 = vunpack.c.l.b16 %v1157
    %v1229 = vunpack.c.l.b16 %v1158
    %v1230 = vunpack.c.l.b16 %v1159
    %v1231 = vpack.c.b16 %v1216, %v1215
    %v1232 = vpack.c.b16 %v1218, %v1217
    %v1233 = vpack.c.b16 %v1220, %v1219
    %v1234 = vpack.c.b16 %v1222, %v1221
    %v1235 = vpack.c.b16 %v1224, %v1223
    %v1236 = vpack.c.b16 %v1226, %v1225
    %v1237 = vpack.c.b16 %v1228, %v1227
    %v1238 = vpack.c.b16 %v1230, %v1229
    %1247 = vmatprep.subr.bf16.mxu0 0
    %1248 = vmatpush1.bf16.msra.mxu0 %v1238
    %1249 = vmatprep.subr.bf16.mxu0 0
    %1250 = vmatpush1.bf16.msra.mxu0 %v1237
    %1251 = vmatprep.subr.bf16.mxu0 0
    %1252 = vmatpush1.bf16.msra.mxu0 %v1236
    %1253 = vmatprep.subr.bf16.mxu0 0
    %1254 = vmatpush1.bf16.msra.mxu0 %v1235
    %1255 = vmatprep.subr.bf16.mxu0 0
    %1256 = vmatpush1.bf16.msra.mxu0 %v1234
    %1257 = vmatprep.subr.bf16.mxu0 0
    %1258 = vmatpush1.bf16.msra.mxu0 %v1233
    %1259 = vmatprep.subr.bf16.mxu0 0
    %1260 = vmatpush1.bf16.msra.mxu0 %v1232
    %1261 = vmatprep.subr.bf16.mxu0 0
    %1262 = vmatpush1.bf16.msra.mxu0 %v1231
    %1263 = vmatprep.subr.bf16.mxu0 0
    %1264 = vmatpush2.bf16.msra.mxu0 0
    %1265 = vmatprep.subr.bf16.mxu0 0
    %1266 = vmatpush2.bf16.msra.mxu0 0
    %1267 = vmatprep.subr.bf16.mxu0 0
    %1268 = vmatpush2.bf16.msra.mxu0 0
    %1269 = vmatprep.subr.bf16.mxu0 0
    %1270 = vmatpush2.bf16.msra.mxu0 0
    %1271 = vmatprep.subr.bf16.mxu0 0
    %1272 = vmatpush2.bf16.msra.mxu0 0
    %1273 = vmatprep.subr.bf16.mxu0 0
    %1274 = vmatpush2.bf16.msra.mxu0 0
    %1275 = vmatprep.subr.bf16.mxu0 0
    %1276 = vmatpush2.bf16.msra.mxu0 0
    %1277 = vmatprep.subr.bf16.mxu0 0
    %1278 = vmatpush2.bf16.msra.mxu0 0
    %1279 = vmatprep.mubr.bf16.mxu0 0
    %1280 = vmatmul.mubr.bf16.gmra.mxu0 %v1197
    %v1281 = vpop.f32.mrf.mxu0
    %v1282 = vadd.f32 %v1165, %v1281
    %v1283 = vpop.f32.mrf.mxu0
    %v1284 = vpop.f32.mrf.mxu0
    %v1285 = vpop.f32.mrf.mxu0
    %1286 = vdwg.mxu0
    %1287 = vst [vmem:[#allocation2] sm:$0xff] %v1282
    // Predicated region
    $region22: #{tpu_custom_call.1} parent=1 // pred_check
      _
    $region23: #{tpu_custom_call.1} parent=1 // pred_check_branch
      %1289 = sbr.rel (0) target = $region25
    $region24: #{tpu_custom_call.1} parent=1 // pred_region
      %s1291 = ssub.s32 128, 128
      %1292 = vsyncadd [#allocation3], %s1291
      %s1294 = sshll.u32 [#allocation2], 4
      %s1295 = int_to_ptr.vmem [resolvable:$true] %s1294
      %1297 = dma.vmem_to_hbm [thread:$0]  %s1295, 128, %s5, [#allocation3]
    $region25: #{tpu_custom_call.1} parent=1 // pred_fallthru
      _
    // Predicated region
    $region26: #{tpu_custom_call.1} parent=1 // pred_check
      _
    $region27: #{tpu_custom_call.1} parent=1 // pred_check_branch
      %1299 = sbr.rel (0) target = $region29
    $region28: #{tpu_custom_call.1} parent=1 // pred_region
      %1300 = dma.done [#allocation3], 128
    $region29: #{tpu_custom_call.1} parent=1 // pred_fallthru
      _
    %1301 = vsyncpa [#allocation3], 1

</llo_original>
